<compile_context>
chip_gen: v6e
topology: v6e:2x2x1
jax: 0.10.0
libtpu: 0.0.40
codegen_flags: <defaults>
</compile_context>

<pallas_src>
from functools import partial

import jax
import jax.numpy as jnp
from jax.experimental import pallas as pl
from jax.experimental.pallas import tpu as pltpu

EPS = 1e-5
_LANE = 128


def _generator_kernel(x_ref, w_ref, rows_ref, o_ref, *, k1):
    x = x_ref[...].astype(jnp.float32)
    rows = rows_ref[...].astype(jnp.float32)
    g1, be1 = rows[0:1, :], rows[1:2, :]
    g2, be2 = rows[2:3, :], rows[3:4, :]
    b3 = rows[4:5, :]

    def bn_relu(h, g, be):
        # Training-mode BatchNorm1d, biased variance, computed on centered
        # activations (robust: no E[h^2]-mean^2 cancellation).
        mean = jnp.mean(h, axis=0, keepdims=True)
        c = h - mean
        var = jnp.mean(c * c, axis=0, keepdims=True)
        scale = g * jax.lax.rsqrt(var + EPS)  # rsqrt -> EUP (free slot)
        return jnp.maximum(c * scale + be, 0.0)

    # Layer 1: Linear (bias cancelled by BN) + BN + ReLU.
    # Static K = k1 (Z rounded up to a sublane multiple) slice of the packed
    # weights -> layer-1 matmul contracts over 32, not 128.
    h = jnp.dot(x, w_ref[0, :k1, :], preferred_element_type=jnp.float32)
    h = bn_relu(h, g1, be1)

    # Layer 2: Linear (bias cancelled by BN) + BN + ReLU
    h = jnp.dot(h, w_ref[1], preferred_element_type=jnp.float32)
    h = bn_relu(h, g2, be2)

    # Layer 3: Linear (bias kept); store only the real Z output columns.
    out = jnp.dot(h, w_ref[2], preferred_element_type=jnp.float32) + b3
    o_ref[...] = out[:, : o_ref.shape[-1]].astype(o_ref.dtype)


def generator_forward(x, packed):
    """Single forward call. x: (B, Z) float32. packed: {'w': (3,ZP,ZP), 'rows': (8,ZP)}."""
    B, Z = x.shape
    w, rows = packed["w"], packed["rows"]
    ZP = w.shape[-1]
    # Round layer-1 contraction dim up to a sublane multiple (8). No-op when Z%8==0
    # (padded weight rows are zero, so the result is unchanged).
    k1 = -(-Z // 8) * 8
    x_in = x if k1 == Z else jnp.pad(x, ((0, 0), (0, k1 - Z)))

    full = lambda shape: pl.BlockSpec(shape, lambda: (0,) * len(shape))
    flops = 2 * B * (k1 * ZP + 2 * ZP * ZP) + 16 * B * ZP
    bytes_accessed = 4 * (x_in.size + w.size + rows.size + B * Z)

    return pl.pallas_call(
        partial(_generator_kernel, k1=k1),
        out_shape=jax.ShapeDtypeStruct((B, Z), x.dtype),
        grid=(),
        in_specs=[full(x_in.shape), full(w.shape), full(rows.shape)],
        out_specs=full((B, Z)),
        cost_estimate=pl.CostEstimate(
            flops=flops, transcendentals=2 * ZP, bytes_accessed=bytes_accessed
        ),
    )(x_in, w, rows)


def generator_forward_batched(xg, packed):
    """Throughput path: xg: (G, B, Z) = G independent batches. Each group gets its
    own BN statistics (identical to calling the module G times). Weights/rows have
    constant index_maps (VMEM-resident across steps); grid axis is 'parallel' so
    v7x can use both TensorCores and x/out tiles are pipeline double-buffered."""
    G, B, Z = xg.shape
    w, rows = packed["w"], packed["rows"]
    ZP = w.shape[-1]
    k1 = -(-Z // 8) * 8
    x_in = xg if k1 == Z else jnp.pad(xg, ((0, 0), (0, 0), (0, k1 - Z)))

    flops = G * (2 * B * (k1 * ZP + 2 * ZP * ZP) + 16 * B * ZP)
    bytes_accessed = 4 * (x_in.size + w.size + rows.size + G * B * Z)

    return pl.pallas_call(
        partial(_generator_kernel, k1=k1),
        out_shape=jax.ShapeDtypeStruct((G, B, Z), xg.dtype),
        grid=(G,),
        in_specs=[
            pl.BlockSpec((None, B, k1), lambda g: (g, 0, 0)),
            pl.BlockSpec(w.shape, lambda g: (0, 0, 0)),      # weights stay resident
            pl.BlockSpec(rows.shape, lambda g: (0, 0)),
        ],
        out_specs=pl.BlockSpec((None, B, Z), lambda g: (g, 0, 0)),
        compiler_params=pltpu.CompilerParams(dimension_semantics=("parallel",)),
        cost_estimate=pl.CostEstimate(
            flops=flops, transcendentals=G * 2 * ZP, bytes_accessed=bytes_accessed
        ),
    )(x_in, w, rows)


def init_params(key, z_size):
    """Deterministic init mirroring the PyTorch module:
    Linear.weight ~ U(-0.02, 0.02), Linear.bias = 0, BN gamma = 1, beta = 0.
    Weights stored as (in, out) (transpose of PyTorch's (out, in))."""
    k1, k2, k3 = jax.random.split(key, 3)
    u = lambda k: jax.random.uniform(
        k, (z_size, z_size), jnp.float32, minval=-0.02, maxval=0.02
    )
    zeros = jnp.zeros((z_size,), jnp.float32)
    ones = jnp.ones((z_size,), jnp.float32)
    return {
        "w1": u(k1), "w2": u(k2), "w3": u(k3),
        "b1": zeros, "b2": zeros, "b3": zeros,
        "g1": ones, "be1": zeros,
        "g2": ones, "be2": zeros,
    }


def pack_params(p, z_size):
    """Zero-pad features to a 128-lane multiple and pack into 2 kernel arrays.
    b1/b2 intentionally omitted (exactly cancelled by training-mode BN)."""
    ZP = max(_LANE, pl.cdiv(z_size, _LANE) * _LANE)
    pad_w = lambda w: jnp.pad(w, ((0, ZP - z_size), (0, ZP - z_size)))
    pad_r = lambda r: jnp.pad(r, (0, ZP - z_size))
    w = jnp.stack([pad_w(p["w1"]), pad_w(p["w2"]), pad_w(p["w3"])], axis=0)
    zrow = jnp.zeros((ZP,), jnp.float32)
    rows = jnp.stack(
        [pad_r(p["g1"]), pad_r(p["be1"]),
         pad_r(p["g2"]), pad_r(p["be2"]),
         pad_r(p["b3"]), zrow, zrow, zrow],
        axis=0,
    )
    return {"w": w, "rows": rows}


def _reference_forward(x, p):
    """Pure-JAX reference matching PyTorch training-mode forward."""
    def bn_relu(h, g, be):
        m = h.mean(0, keepdims=True)
        v = ((h - m) ** 2).mean(0, keepdims=True)
        return jnp.maximum((h - m) / jnp.sqrt(v + EPS) * g + be, 0.0)

    h = bn_relu(x @ p["w1"] + p["b1"], p["g1"], p["be1"])
    h = bn_relu(h @ p["w2"] + p["b2"], p["g2"], p["be2"])
    return h @ p["w3"] + p["b3"]


# TODO(synk): running_mean/running_var (momentum=0.1) buffer updates of
# BatchNorm1d are a training side-effect and are not produced by this kernel;
# eval-mode (running-stats) inference would also need b1/b2 reinstated.

if __name__ == "__main__":
    key = jax.random.PRNGKey(0)
    k_param, k_x, k_xg = jax.random.split(key, 3)

    batch = 8
    z_size = 32
    groups = 4

    params = init_params(k_param, z_size)
    packed = pack_params(params, z_size)

    # Single-call path (matches one module.forward on an 8x32 batch).
    epsilons = jax.random.normal(k_x, (batch, z_size), jnp.float32)
    out = jax.block_until_ready(generator_forward(epsilons, packed))
    ref = _reference_forward(epsilons, params)
    assert out.shape == (batch, z_size)
    assert jnp.allclose(out, ref, atol=1e-4, rtol=1e-4), float(
        jnp.max(jnp.abs(out - ref))
    )

    # Batched-groups path (G independent batches, per-group BN stats).
    eps_g = jax.random.normal(k_xg, (groups, batch, z_size), jnp.float32)
    out_g = jax.block_until_ready(generator_forward_batched(eps_g, packed))
    ref_g = jax.vmap(lambda xb: _reference_forward(xb, params))(eps_g)
    assert out_g.shape == (groups, batch, z_size)
    assert jnp.allclose(out_g, ref_g, atol=1e-4, rtol=1e-4), float(
        jnp.max(jnp.abs(out_g - ref_g))
    )

    print("KERNEL_OK")
</pallas_src>

<mosaic_0001>
module attributes {stable_mosaic.version = 11 : i64} {
  func.func @_generator_kernel(%arg0: memref<8x32xf32, #tpu.memory_space<vmem>>, %arg1: memref<3x128x128xf32, #tpu.memory_space<vmem>>, %arg2: memref<8x128xf32, #tpu.memory_space<vmem>>, %arg3: memref<8x32xf32, #tpu.memory_space<vmem>>) attributes {dimension_semantics = [], scalar_prefetch = 0 : i64, scratch_operands = 0 : i64, tpu.core_type = #tpu.core_type<tc>} {
    %c0 = arith.constant 0 : index
    %c0_0 = arith.constant 0 : index
    %0 = vector.load %arg0[%c0, %c0_0] : memref<8x32xf32, #tpu.memory_space<vmem>>, vector<8x32xf32>
    %c0_1 = arith.constant 0 : index
    %c0_2 = arith.constant 0 : index
    %1 = vector.load %arg2[%c0_1, %c0_2] : memref<8x128xf32, #tpu.memory_space<vmem>>, vector<8x128xf32>
    %2 = vector.extract_strided_slice %1 {offsets = [0, 0], sizes = [1, 128], strides = [1, 1]} : vector<8x128xf32> to vector<1x128xf32>
    %3 = vector.extract_strided_slice %1 {offsets = [1, 0], sizes = [1, 128], strides = [1, 1]} : vector<8x128xf32> to vector<1x128xf32>
    %4 = vector.extract_strided_slice %1 {offsets = [2, 0], sizes = [1, 128], strides = [1, 1]} : vector<8x128xf32> to vector<1x128xf32>
    %5 = vector.extract_strided_slice %1 {offsets = [3, 0], sizes = [1, 128], strides = [1, 1]} : vector<8x128xf32> to vector<1x128xf32>
    %6 = vector.extract_strided_slice %1 {offsets = [4, 0], sizes = [1, 128], strides = [1, 1]} : vector<8x128xf32> to vector<1x128xf32>
    %c0_3 = arith.constant 0 : index
    %c0_4 = arith.constant 0 : index
    %c0_5 = arith.constant 0 : index
    %7 = vector.load %arg1[%c0_3, %c0_4, %c0_5] : memref<3x128x128xf32, #tpu.memory_space<vmem>>, vector<1x32x128xf32>
    %8 = vector.shape_cast %7 : vector<1x32x128xf32> to vector<32x128xf32>
    %cst = arith.constant dense<0.000000e+00> : vector<8x128xf32>
    %9 = tpu.matmul %0, %8, %cst {dimension_numbers = #tpu.dot_dimension_numbers<[1], [0], [0], [1], [0, 0, 1, 1], [], []>} : vector<8x32xf32>, vector<32x128xf32>, vector<8x128xf32> -> vector<8x128xf32>
    %cst_6 = arith.constant dense<0.000000e+00> : vector<128xf32>
    %10 = vector.multi_reduction <add>, %9, %cst_6 [0] : vector<8x128xf32> to vector<128xf32>
    %11 = vector.shape_cast %10 : vector<128xf32> to vector<1x128xf32>
    %cst_7 = arith.constant 8.000000e+00 : f32
    %12 = vector.broadcast %cst_7 : f32 to vector<1x128xf32>
    %13 = arith.divf %11, %12 : vector<1x128xf32>
    %14 = vector.broadcast %13 : vector<1x128xf32> to vector<8x128xf32>
    %15 = arith.subf %9, %14 : vector<8x128xf32>
    %16 = arith.mulf %15, %15 : vector<8x128xf32>
    %cst_8 = arith.constant dense<0.000000e+00> : vector<128xf32>
    %17 = vector.multi_reduction <add>, %16, %cst_8 [0] : vector<8x128xf32> to vector<128xf32>
    %18 = vector.shape_cast %17 : vector<128xf32> to vector<1x128xf32>
    %cst_9 = arith.constant 8.000000e+00 : f32
    %19 = vector.broadcast %cst_9 : f32 to vector<1x128xf32>
    %20 = arith.divf %18, %19 : vector<1x128xf32>
    %cst_10 = arith.constant 9.99999974E-6 : f32
    %21 = vector.broadcast %cst_10 : f32 to vector<1x128xf32>
    %22 = arith.addf %20, %21 : vector<1x128xf32>
    %23 = math.rsqrt %22 : vector<1x128xf32>
    %24 = arith.mulf %2, %23 : vector<1x128xf32>
    %25 = vector.broadcast %24 : vector<1x128xf32> to vector<8x128xf32>
    %26 = arith.mulf %15, %25 : vector<8x128xf32>
    %27 = vector.broadcast %3 : vector<1x128xf32> to vector<8x128xf32>
    %28 = arith.addf %26, %27 : vector<8x128xf32>
    %cst_11 = arith.constant 0.000000e+00 : f32
    %29 = vector.broadcast %cst_11 : f32 to vector<8x128xf32>
    %30 = arith.maximumf %28, %29 : vector<8x128xf32>
    %c1 = arith.constant 1 : index
    %c0_12 = arith.constant 0 : index
    %c0_13 = arith.constant 0 : index
    %31 = vector.load %arg1[%c1, %c0_12, %c0_13] : memref<3x128x128xf32, #tpu.memory_space<vmem>>, vector<1x128x128xf32>
    %32 = vector.shape_cast %31 : vector<1x128x128xf32> to vector<128x128xf32>
    %cst_14 = arith.constant dense<0.000000e+00> : vector<8x128xf32>
    %33 = tpu.matmul %30, %32, %cst_14 {dimension_numbers = #tpu.dot_dimension_numbers<[1], [0], [0], [1], [0, 0, 1, 1], [], []>} : vector<8x128xf32>, vector<128x128xf32>, vector<8x128xf32> -> vector<8x128xf32>
    %cst_15 = arith.constant dense<0.000000e+00> : vector<128xf32>
    %34 = vector.multi_reduction <add>, %33, %cst_15 [0] : vector<8x128xf32> to vector<128xf32>
    %35 = vector.shape_cast %34 : vector<128xf32> to vector<1x128xf32>
    %cst_16 = arith.constant 8.000000e+00 : f32
    %36 = vector.broadcast %cst_16 : f32 to vector<1x128xf32>
    %37 = arith.divf %35, %36 : vector<1x128xf32>
    %38 = vector.broadcast %37 : vector<1x128xf32> to vector<8x128xf32>
    %39 = arith.subf %33, %38 : vector<8x128xf32>
    %40 = arith.mulf %39, %39 : vector<8x128xf32>
    %cst_17 = arith.constant dense<0.000000e+00> : vector<128xf32>
    %41 = vector.multi_reduction <add>, %40, %cst_17 [0] : vector<8x128xf32> to vector<128xf32>
    %42 = vector.shape_cast %41 : vector<128xf32> to vector<1x128xf32>
    %cst_18 = arith.constant 8.000000e+00 : f32
    %43 = vector.broadcast %cst_18 : f32 to vector<1x128xf32>
    %44 = arith.divf %42, %43 : vector<1x128xf32>
    %cst_19 = arith.constant 9.99999974E-6 : f32
    %45 = vector.broadcast %cst_19 : f32 to vector<1x128xf32>
    %46 = arith.addf %44, %45 : vector<1x128xf32>
    %47 = math.rsqrt %46 : vector<1x128xf32>
    %48 = arith.mulf %4, %47 : vector<1x128xf32>
    %49 = vector.broadcast %48 : vector<1x128xf32> to vector<8x128xf32>
    %50 = arith.mulf %39, %49 : vector<8x128xf32>
    %51 = vector.broadcast %5 : vector<1x128xf32> to vector<8x128xf32>
    %52 = arith.addf %50, %51 : vector<8x128xf32>
    %cst_20 = arith.constant 0.000000e+00 : f32
    %53 = vector.broadcast %cst_20 : f32 to vector<8x128xf32>
    %54 = arith.maximumf %52, %53 : vector<8x128xf32>
    %c2 = arith.constant 2 : index
    %c0_21 = arith.constant 0 : index
    %c0_22 = arith.constant 0 : index
    %55 = vector.load %arg1[%c2, %c0_21, %c0_22] : memref<3x128x128xf32, #tpu.memory_space<vmem>>, vector<1x128x128xf32>
    %56 = vector.shape_cast %55 : vector<1x128x128xf32> to vector<128x128xf32>
    %cst_23 = arith.constant dense<0.000000e+00> : vector<8x128xf32>
    %57 = tpu.matmul %54, %56, %cst_23 {dimension_numbers = #tpu.dot_dimension_numbers<[1], [0], [0], [1], [0, 0, 1, 1], [], []>} : vector<8x128xf32>, vector<128x128xf32>, vector<8x128xf32> -> vector<8x128xf32>
    %58 = vector.broadcast %6 : vector<1x128xf32> to vector<8x128xf32>
    %59 = arith.addf %57, %58 : vector<8x128xf32>
    %60 = vector.extract_strided_slice %59 {offsets = [0, 0], sizes = [8, 32], strides = [1, 1]} : vector<8x128xf32> to vector<8x32xf32>
    %c0_24 = arith.constant 0 : index
    %c0_25 = arith.constant 0 : index
    %61 = vector.load %arg3[%c0_24, %c0_25] : memref<8x32xf32, #tpu.memory_space<vmem>>, vector<8x32xf32>
    tpu.vector_store %arg3[%c0_24, %c0_25], %60 {strides = array<i32>} : memref<8x32xf32, #tpu.memory_space<vmem>>, vector<8x32xf32>,
    return
  }
}

</mosaic_0001>

<llo_original>
// kernel: tpu_custom_call.1
$region0: #{tpu_custom_call.1}
  #allocation0 [shape = 'u32[]', space=smem, size = 0x4, offset = 0x4, fixed_abs, tag = 'smem constant byte address 0x4 - core index']
  #allocation1 [shape = 'u32[144,128]{1,0:T(1,128)}', space=vmem, size = 0x12000, scoped, tag = 'internal scratch']
  %s0 = inlined_call_operand.hbm [shape: f32[8,32], index: 0, kind: input, shape index: {}]
  %s1 = inlined_call_operand.hbm [shape: f32[3,128,128], index: 1, kind: input, shape index: {}]
  %s2 = inlined_call_operand.hbm [shape: f32[8,128], index: 2, kind: input, shape index: {}]
  %s3 = inlined_call_operand.hbm [shape: f32[8,32], index: 3, kind: output, shape index: {}]
  %s4 = sld [smem:[#allocation0]]
  $region34: #{tpu_custom_call.1} parent=0
    _
  %s6 = ssub.s32 1, %s4
  %s7 = scalar_select 0, %s6, %s4
  $region1: #{tpu_custom_call.1} parent=0
    #allocation2 [shape = 'u8[4096]{0}', space=vmem, size = 0x1000, scoped, tag = 'input window, operand 0, single buffered']
    #allocation3 [shape = 's32[1]{0}', space=sflag, size = 0x4, scoped, tag = 'scoped memory for tpu_custom_call.1']
    #allocation4 [shape = 's32[1]{0}', space=sflag, size = 0x4, scoped, tag = 'scoped memory for tpu_custom_call.1']
    #allocation5 [shape = 'u8[196608]{0}', space=vmem, size = 0x30000, scoped, tag = 'input window, operand 1, single buffered']
    #allocation6 [shape = 's32[1]{0}', space=sflag, size = 0x4, scoped, tag = 'scoped memory for tpu_custom_call.1']
    #allocation7 [shape = 'u8[4096]{0}', space=vmem, size = 0x1000, scoped, tag = 'input window, operand 2, single buffered']
    #allocation8 [shape = 'u8[4096]{0}', space=vmem, size = 0x1000, scoped, tag = 'output window, operand 0, single buffered']
    %8 = vsyncpa [#allocation3], 0
    %9 = vsyncpa [#allocation6], 0
    %10 = vsyncpa [#allocation4], 0
    // Predicated region
    $region2: #{tpu_custom_call.1} parent=1 // pred_check
      _
    $region3: #{tpu_custom_call.1} parent=1 // pred_check_branch
      %12 = sbr.rel (0) target = $region5
    $region4: #{tpu_custom_call.1} parent=1 // pred_region
      %s14 = ssub.s32 128, 128
      %15 = vsyncadd [#allocation3], %s14
      %s17 = sshll.u32 [#allocation2], 4
      %s18 = int_to_ptr.vmem [resolvable:$true] %s17
      %20 = dma.hbm_to_vmem [thread:$0]  %s0, 128, %s18, [#allocation3]
    $region5: #{tpu_custom_call.1} parent=1 // pred_fallthru
      _
    // Predicated region
    $region6: #{tpu_custom_call.1} parent=1 // pred_check
      _
    $region7: #{tpu_custom_call.1} parent=1 // pred_check_branch
      %22 = sbr.rel (0) target = $region9
    $region8: #{tpu_custom_call.1} parent=1 // pred_region
      %s24 = ssub.s32 6144, 6144
      %25 = vsyncadd [#allocation6], %s24
      %s26 = sshll.u32 [#allocation5], 4
      %s27 = int_to_ptr.vmem [resolvable:$true] %s26
      %32 = dma.hbm_to_vmem [thread:$0]  %s1, 6144, %s27, [#allocation6], 128, 128, 8
    $region9: #{tpu_custom_call.1} parent=1 // pred_fallthru
      _
    // Predicated region
    $region10: #{tpu_custom_call.1} parent=1 // pred_check
      _
    $region11: #{tpu_custom_call.1} parent=1 // pred_check_branch
      %34 = sbr.rel (0) target = $region13
    $region12: #{tpu_custom_call.1} parent=1 // pred_region
      %s36 = ssub.s32 128, 128
      %37 = vsyncadd [#allocation6], %s36
      %s39 = sshll.u32 [#allocation7], 4
      %s40 = int_to_ptr.vmem [resolvable:$true] %s39
      %42 = dma.hbm_to_vmem [thread:$0]  %s2, 128, %s40, [#allocation6]
    $region13: #{tpu_custom_call.1} parent=1 // pred_fallthru
      _
    // Predicated region
    $region14: #{tpu_custom_call.1} parent=1 // pred_check
      _
    $region15: #{tpu_custom_call.1} parent=1 // pred_check_branch
      %44 = sbr.rel (0) target = $region17
    $region16: #{tpu_custom_call.1} parent=1 // pred_region
      %45 = dma.done [#allocation3], 128
    $region17: #{tpu_custom_call.1} parent=1 // pred_fallthru
      _
    // Predicated region
    $region18: #{tpu_custom_call.1} parent=1 // pred_check
      _
    $region19: #{tpu_custom_call.1} parent=1 // pred_check_branch
      %47 = sbr.rel (0) target = $region21
    $region20: #{tpu_custom_call.1} parent=1 // pred_region
      %48 = dma.done [#allocation6], 6144
    $region21: #{tpu_custom_call.1} parent=1 // pred_fallthru
      _
    // Predicated region
    $region22: #{tpu_custom_call.1} parent=1 // pred_check
      _
    $region23: #{tpu_custom_call.1} parent=1 // pred_check_branch
      %50 = sbr.rel (0) target = $region25
    $region24: #{tpu_custom_call.1} parent=1 // pred_region
      %51 = dma.done [#allocation6], 128
    $region25: #{tpu_custom_call.1} parent=1 // pred_fallthru
      _
    %v52 = vld [vmem:[#allocation2] sm:$0xff]
    %v53 = vld [vmem:[#allocation7] sm:$0xff]
    %v54 = vld [vmem:[#allocation5] sm:$0xff]
    %v55 = vld [vmem:[#allocation5 + $0x8] sm:$0xff]
    %v56 = vld [vmem:[#allocation5 + $0x10] sm:$0xff]
    %v57 = vld [vmem:[#allocation5 + $0x18] sm:$0xff]
    %vm58 = vcmask 261120
    %v60 = vsel %vm58, %v52, 0
    %62 = vmatprep.subr.mxu0 0.0
    %63 = vmatpush1.msra.mxu0 0.0
    %64 = vmatprep.subr.mxu0 0.0
    %65 = vmatpush1.msra.mxu0 0.0
    %66 = vmatprep.subr.mxu0 0.0
    %67 = vmatpush1.msra.mxu0 0.0
    %68 = vmatprep.subr.mxu0 0.0
    %69 = vmatpush1.msra.mxu0 0.0
    %70 = vmatprep.subr.mxu0 0.0
    %71 = vmatpush1.msra.mxu0 0.0
    %72 = vmatprep.subr.mxu0 0.0
    %73 = vmatpush1.msra.mxu0 0.0
    %74 = vmatprep.subr.mxu0 0.0
    %75 = vmatpush1.msra.mxu0 0.0
    %76 = vmatprep.subr.mxu0 0.0
    %77 = vmatpush1.msra.mxu0 0.0
    %78 = vmatprep.subr.mxu0 0.0
    %79 = vmatpush1.msra.mxu0 0.0
    %80 = vmatprep.subr.mxu0 0.0
    %81 = vmatpush1.msra.mxu0 0.0
    %82 = vmatprep.subr.mxu0 0.0
    %83 = vmatpush1.msra.mxu0 0.0
    %84 = vmatprep.subr.mxu0 0.0
    %85 = vmatpush1.msra.mxu0 0.0
    %86 = vmatprep.subr.mxu0 0.0
    %87 = vmatpush1.msra.mxu0 %v57
    %88 = vmatprep.subr.mxu0 0.0
    %89 = vmatpush1.msra.mxu0 %v56
    %90 = vmatprep.subr.mxu0 0.0
    %91 = vmatpush1.msra.mxu0 %v55
    %92 = vmatprep.subr.mxu0 0.0
    %93 = vmatpush1.msra.mxu0 %v54
    %94 = vmatprep.subr.mxu0 0.0
    %95 = vmatpush2.msra.mxu0 0.0
    %96 = vmatprep.subr.mxu0 0.0
    %97 = vmatpush2.msra.mxu0 0.0
    %98 = vmatprep.subr.mxu0 0.0
    %99 = vmatpush2.msra.mxu0 0.0
    %100 = vmatprep.subr.mxu0 0.0
    %101 = vmatpush2.msra.mxu0 0.0
    %102 = vmatprep.subr.mxu0 0.0
    %103 = vmatpush2.msra.mxu0 0.0
    %104 = vmatprep.subr.mxu0 0.0
    %105 = vmatpush2.msra.mxu0 0.0
    %106 = vmatprep.subr.mxu0 0.0
    %107 = vmatpush2.msra.mxu0 0.0
    %108 = vmatprep.subr.mxu0 0.0
    %109 = vmatpush2.msra.mxu0 0.0
    %110 = vmatprep.subr.mxu0 0.0
    %111 = vmatpush2.msra.mxu0 0.0
    %112 = vmatprep.subr.mxu0 0.0
    %113 = vmatpush2.msra.mxu0 0.0
    %114 = vmatprep.subr.mxu0 0.0
    %115 = vmatpush2.msra.mxu0 0.0
    %116 = vmatprep.subr.mxu0 0.0
    %117 = vmatpush2.msra.mxu0 0.0
    %118 = vmatprep.subr.mxu0 0.0
    %119 = vmatpush2.msra.mxu0 0.0
    %120 = vmatprep.subr.mxu0 0.0
    %121 = vmatpush2.msra.mxu0 0.0
    %122 = vmatprep.subr.mxu0 0.0
    %123 = vmatpush2.msra.mxu0 0.0
    %124 = vmatprep.subr.mxu0 0.0
    %125 = vmatpush2.msra.mxu0 0.0
    %126 = vmatprep.mubr.f32.mxu0 0.0
    %127 = vmatmul.mubr.f32.gmra.mxu0 %v60
    %v128 = vpop.f32.mrf.mxu0
    %v129 = vadd.f32 0.0, %v128
    %v130 = vpop.f32.mrf.mxu0
    %131 = vdwg.mxu0
    %v132 = vrot.slane %v129, 4
    %v133 = vadd.f32 %v129, %v132
    %v134 = vrot.slane %v133, 2
    %v135 = vadd.f32 %v133, %v134
    %v136 = vrot.slane %v135, 1
    %v137 = vadd.f32 %v135, %v136
    %v138 = vrcp.pop 8.0
    %v139 = vmul.f32 %v137, %v138
    %v140 = vsub.f32 %v129, %v139
    %v141 = vmul.f32 %v140, %v140
    %v142 = vrot.slane %v141, 4
    %v143 = vadd.f32 %v141, %v142
    %v144 = vrot.slane %v143, 2
    %v145 = vadd.f32 %v143, %v144
    %v146 = vrot.slane %v145, 1
    %v147 = vadd.f32 %v145, %v146
    %v148 = vmul.f32 %v147, %v138
    %v149 = vadd.f32 %v148, 1e-05
    %v150 = vrsqrt.pop %v149
    %v151 = vmul.f32 %v53, %v150
    %v152 = vlaneseq
    %v153 = vshrl.u32 %v152, 7
    %v154 = vsub.s32 0, %v153
    %v155 = vrot.slane %v151, %v154
    %v156 = vmul.f32 %v140, %v155
    %v157 = vlaneseq
    %v158 = vshrl.u32 %v157, 7
    %v159 = vsub.s32 1, %v158
    %v160 = vrot.slane %v53, %v159
    %v161 = vadd.f32 %v156, %v160
    %v162 = vmax.f32 %v161, 0.0
    %s163 = scalar_lea.vmem [#allocation5], 128
    %v164 = vld [vmem:[%s163] sm:$0xff]
    %v165 = vld [vmem:[%s163 + $0x8] sm:$0xff]
    %v166 = vld [vmem:[%s163 + $0x10] sm:$0xff]
    %v167 = vld [vmem:[%s163 + $0x18] sm:$0xff]
    %v168 = vld [vmem:[%s163 + $0x20] sm:$0xff]
    %v169 = vld [vmem:[%s163 + $0x28] sm:$0xff]
    %v170 = vld [vmem:[%s163 + $0x30] sm:$0xff]
    %v171 = vld [vmem:[%s163 + $0x38] sm:$0xff]
    %v172 = vld [vmem:[%s163 + $0x40] sm:$0xff]
    %v173 = vld [vmem:[%s163 + $0x48] sm:$0xff]
    %v174 = vld [vmem:[%s163 + $0x50] sm:$0xff]
    %v175 = vld [vmem:[%s163 + $0x58] sm:$0xff]
    %v176 = vld [vmem:[%s163 + $0x60] sm:$0xff]
    %v177 = vld [vmem:[%s163 + $0x68] sm:$0xff]
    %v178 = vld [vmem:[%s163 + $0x70] sm:$0xff]
    %v179 = vld [vmem:[%s163 + $0x78] sm:$0xff]
    %180 = vmatprep.subr.mxu0 0.0
    %181 = vmatpush1.msra.mxu0 %v179
    %182 = vmatprep.subr.mxu0 0.0
    %183 = vmatpush1.msra.mxu0 %v178
    %184 = vmatprep.subr.mxu0 0.0
    %185 = vmatpush1.msra.mxu0 %v177
    %186 = vmatprep.subr.mxu0 0.0
    %187 = vmatpush1.msra.mxu0 %v176
    %188 = vmatprep.subr.mxu0 0.0
    %189 = vmatpush1.msra.mxu0 %v175
    %190 = vmatprep.subr.mxu0 0.0
    %191 = vmatpush1.msra.mxu0 %v174
    %192 = vmatprep.subr.mxu0 0.0
    %193 = vmatpush1.msra.mxu0 %v173
    %194 = vmatprep.subr.mxu0 0.0
    %195 = vmatpush1.msra.mxu0 %v172
    %196 = vmatprep.subr.mxu0 0.0
    %197 = vmatpush1.msra.mxu0 %v171
    %198 = vmatprep.subr.mxu0 0.0
    %199 = vmatpush1.msra.mxu0 %v170
    %200 = vmatprep.subr.mxu0 0.0
    %201 = vmatpush1.msra.mxu0 %v169
    %202 = vmatprep.subr.mxu0 0.0
    %203 = vmatpush1.msra.mxu0 %v168
    %204 = vmatprep.subr.mxu0 0.0
    %205 = vmatpush1.msra.mxu0 %v167
    %206 = vmatprep.subr.mxu0 0.0
    %207 = vmatpush1.msra.mxu0 %v166
    %208 = vmatprep.subr.mxu0 0.0
    %209 = vmatpush1.msra.mxu0 %v165
    %210 = vmatprep.subr.mxu0 0.0
    %211 = vmatpush1.msra.mxu0 %v164
    %212 = vmatprep.subr.mxu0 0.0
    %213 = vmatpush2.msra.mxu0 0.0
    %214 = vmatprep.subr.mxu0 0.0
    %215 = vmatpush2.msra.mxu0 0.0
    %216 = vmatprep.subr.mxu0 0.0
    %217 = vmatpush2.msra.mxu0 0.0
    %218 = vmatprep.subr.mxu0 0.0
    %219 = vmatpush2.msra.mxu0 0.0
    %220 = vmatprep.subr.mxu0 0.0
    %221 = vmatpush2.msra.mxu0 0.0
    %222 = vmatprep.subr.mxu0 0.0
    %223 = vmatpush2.msra.mxu0 0.0
    %224 = vmatprep.subr.mxu0 0.0
    %225 = vmatpush2.msra.mxu0 0.0
    %226 = vmatprep.subr.mxu0 0.0
    %227 = vmatpush2.msra.mxu0 0.0
    %228 = vmatprep.subr.mxu0 0.0
    %229 = vmatpush2.msra.mxu0 0.0
    %230 = vmatprep.subr.mxu0 0.0
    %231 = vmatpush2.msra.mxu0 0.0
    %232 = vmatprep.subr.mxu0 0.0
    %233 = vmatpush2.msra.mxu0 0.0
    %234 = vmatprep.subr.mxu0 0.0
    %235 = vmatpush2.msra.mxu0 0.0
    %236 = vmatprep.subr.mxu0 0.0
    %237 = vmatpush2.msra.mxu0 0.0
    %238 = vmatprep.subr.mxu0 0.0
    %239 = vmatpush2.msra.mxu0 0.0
    %240 = vmatprep.subr.mxu0 0.0
    %241 = vmatpush2.msra.mxu0 0.0
    %242 = vmatprep.subr.mxu0 0.0
    %243 = vmatpush2.msra.mxu0 0.0
    %244 = vmatprep.mubr.f32.mxu0 0.0
    %245 = vmatmul.mubr.f32.gmra.mxu0 %v162
    %v246 = vpop.f32.mrf.mxu0
    %v247 = vadd.f32 0.0, %v246
    %v248 = vpop.f32.mrf.mxu0
    %249 = vdwg.mxu0
    %v250 = vrot.slane %v247, 4
    %v251 = vadd.f32 %v247, %v250
    %v252 = vrot.slane %v251, 2
    %v253 = vadd.f32 %v251, %v252
    %v254 = vrot.slane %v253, 1
    %v255 = vadd.f32 %v253, %v254
    %v256 = vmul.f32 %v255, %v138
    %v257 = vsub.f32 %v247, %v256
    %v258 = vmul.f32 %v257, %v257
    %v259 = vrot.slane %v258, 4
    %v260 = vadd.f32 %v258, %v259
    %v261 = vrot.slane %v260, 2
    %v262 = vadd.f32 %v260, %v261
    %v263 = vrot.slane %v262, 1
    %v264 = vadd.f32 %v262, %v263
    %v265 = vmul.f32 %v264, %v138
    %v266 = vadd.f32 %v265, 1e-05
    %v267 = vrsqrt.pop %v266
    %v268 = vmul.f32 %v53, %v267
    %v269 = vlaneseq
    %v270 = vshrl.u32 %v269, 7
    %v271 = vsub.s32 2, %v270
    %v272 = vrot.slane %v268, %v271
    %v273 = vmul.f32 %v257, %v272
    %v274 = vlaneseq
    %v275 = vshrl.u32 %v274, 7
    %v276 = vsub.s32 3, %v275
    %v277 = vrot.slane %v53, %v276
    %v278 = vadd.f32 %v273, %v277
    %v279 = vmax.f32 %v278, 0.0
    %s280 = scalar_lea.vmem [#allocation5], 256
    %v281 = vld [vmem:[%s280] sm:$0xff]
    %v282 = vld [vmem:[%s280 + $0x8] sm:$0xff]
    %v283 = vld [vmem:[%s280 + $0x10] sm:$0xff]
    %v284 = vld [vmem:[%s280 + $0x18] sm:$0xff]
    %v285 = vld [vmem:[%s280 + $0x20] sm:$0xff]
    %v286 = vld [vmem:[%s280 + $0x28] sm:$0xff]
    %v287 = vld [vmem:[%s280 + $0x30] sm:$0xff]
    %v288 = vld [vmem:[%s280 + $0x38] sm:$0xff]
    %v289 = vld [vmem:[%s280 + $0x40] sm:$0xff]
    %v290 = vld [vmem:[%s280 + $0x48] sm:$0xff]
    %v291 = vld [vmem:[%s280 + $0x50] sm:$0xff]
    %v292 = vld [vmem:[%s280 + $0x58] sm:$0xff]
    %v293 = vld [vmem:[%s280 + $0x60] sm:$0xff]
    %v294 = vld [vmem:[%s280 + $0x68] sm:$0xff]
    %v295 = vld [vmem:[%s280 + $0x70] sm:$0xff]
    %v296 = vld [vmem:[%s280 + $0x78] sm:$0xff]
    %v297 = vlaneseq
    %v298 = vshrl.u32 %v297, 7
    %v299 = vsub.s32 4, %v298
    %v300 = vrot.slane %v53, %v299
    %301 = vmatprep.subr.mxu0 0.0
    %302 = vmatpush1.msra.mxu0 %v296
    %303 = vmatprep.subr.mxu0 0.0
    %304 = vmatpush1.msra.mxu0 %v295
    %305 = vmatprep.subr.mxu0 0.0
    %306 = vmatpush1.msra.mxu0 %v294
    %307 = vmatprep.subr.mxu0 0.0
    %308 = vmatpush1.msra.mxu0 %v293
    %309 = vmatprep.subr.mxu0 0.0
    %310 = vmatpush1.msra.mxu0 %v292
    %311 = vmatprep.subr.mxu0 0.0
    %312 = vmatpush1.msra.mxu0 %v291
    %313 = vmatprep.subr.mxu0 0.0
    %314 = vmatpush1.msra.mxu0 %v290
    %315 = vmatprep.subr.mxu0 0.0
    %316 = vmatpush1.msra.mxu0 %v289
    %317 = vmatprep.subr.mxu0 0.0
    %318 = vmatpush1.msra.mxu0 %v288
    %319 = vmatprep.subr.mxu0 0.0
    %320 = vmatpush1.msra.mxu0 %v287
    %321 = vmatprep.subr.mxu0 0.0
    %322 = vmatpush1.msra.mxu0 %v286
    %323 = vmatprep.subr.mxu0 0.0
    %324 = vmatpush1.msra.mxu0 %v285
    %325 = vmatprep.subr.mxu0 0.0
    %326 = vmatpush1.msra.mxu0 %v284
    %327 = vmatprep.subr.mxu0 0.0
    %328 = vmatpush1.msra.mxu0 %v283
    %329 = vmatprep.subr.mxu0 0.0
    %330 = vmatpush1.msra.mxu0 %v282
    %331 = vmatprep.subr.mxu0 0.0
    %332 = vmatpush1.msra.mxu0 %v281
    %333 = vmatprep.subr.mxu0 0.0
    %334 = vmatpush2.msra.mxu0 0.0
    %335 = vmatprep.subr.mxu0 0.0
    %336 = vmatpush2.msra.mxu0 0.0
    %337 = vmatprep.subr.mxu0 0.0
    %338 = vmatpush2.msra.mxu0 0.0
    %339 = vmatprep.subr.mxu0 0.0
    %340 = vmatpush2.msra.mxu0 0.0
    %341 = vmatprep.subr.mxu0 0.0
    %342 = vmatpush2.msra.mxu0 0.0
    %343 = vmatprep.subr.mxu0 0.0
    %344 = vmatpush2.msra.mxu0 0.0
    %345 = vmatprep.subr.mxu0 0.0
    %346 = vmatpush2.msra.mxu0 0.0
    %347 = vmatprep.subr.mxu0 0.0
    %348 = vmatpush2.msra.mxu0 0.0
    %349 = vmatprep.subr.mxu0 0.0
    %350 = vmatpush2.msra.mxu0 0.0
    %351 = vmatprep.subr.mxu0 0.0
    %352 = vmatpush2.msra.mxu0 0.0
    %353 = vmatprep.subr.mxu0 0.0
    %354 = vmatpush2.msra.mxu0 0.0
    %355 = vmatprep.subr.mxu0 0.0
    %356 = vmatpush2.msra.mxu0 0.0
    %357 = vmatprep.subr.mxu0 0.0
    %358 = vmatpush2.msra.mxu0 0.0
    %359 = vmatprep.subr.mxu0 0.0
    %360 = vmatpush2.msra.mxu0 0.0
    %361 = vmatprep.subr.mxu0 0.0
    %362 = vmatpush2.msra.mxu0 0.0
    %363 = vmatprep.subr.mxu0 0.0
    %364 = vmatpush2.msra.mxu0 0.0
    %365 = vmatprep.mubr.f32.mxu0 0.0
    %366 = vmatmul.mubr.f32.gmra.mxu0 %v279
    %v367 = vpop.f32.mrf.mxu0
    %v368 = vadd.f32 %v300, %v367
    %v369 = vpop.f32.mrf.mxu0
    %370 = vdwg.mxu0
    %371 = vst.msk [vmem:[#allocation8] sm:$0xff] %vm58, %v368
    // Predicated region
    $region26: #{tpu_custom_call.1} parent=1 // pred_check
      _
    $region27: #{tpu_custom_call.1} parent=1 // pred_check_branch
      %373 = sbr.rel (0) target = $region29
    $region28: #{tpu_custom_call.1} parent=1 // pred_region
      %s375 = ssub.s32 128, 128
      %376 = vsyncadd [#allocation4], %s375
      %s378 = sshll.u32 [#allocation8], 4
      %s379 = int_to_ptr.vmem [resolvable:$true] %s378
      %381 = dma.vmem_to_hbm [thread:$0]  %s379, 128, %s3, [#allocation4]
    $region29: #{tpu_custom_call.1} parent=1 // pred_fallthru
      _
    // Predicated region
    $region30: #{tpu_custom_call.1} parent=1 // pred_check
      _
    $region31: #{tpu_custom_call.1} parent=1 // pred_check_branch
      %383 = sbr.rel (0) target = $region33
    $region32: #{tpu_custom_call.1} parent=1 // pred_region
      %384 = dma.done [#allocation4], 128
    $region33: #{tpu_custom_call.1} parent=1 // pred_fallthru
      _
    %385 = vsyncpa [#allocation3], 1
    %386 = vsyncpa [#allocation6], 1
    %387 = vsyncpa [#allocation4], 1

</llo_original>
